<compile_context>
chip_gen: v5e
topology: v5e:2x2
jax: 0.10.0
libtpu: 0.0.40
codegen_flags: <defaults>
</compile_context>

<pallas_src>
import math

import jax
import jax.numpy as jnp
from jax.experimental import pallas as pl
from jax.experimental.pallas import tpu as pltpu


def _round_up(x, n):
    return ((x + n - 1) // n) * n


def _modulator_kernel(x_ref, w_ref, o_ref):
    # x_ref: (TM, dim_in) tile; w_ref: (dim_in, dim_out_pad) resident weight
    # (w0 already folded in); o_ref: (TM, dim_out_pad) lane-dense output tile.
    o_ref[...] = jnp.dot(
        x_ref[...], w_ref[...], preferred_element_type=jnp.float32
    ).astype(o_ref.dtype)


def prepare_modulator_params(weight, w0=30.0, lane=128):
    """One-time parameter prep (outside the per-call hot path).

    weight: (dim_out, dim_in), PyTorch nn.Linear layout.
    Returns a (dim_in, dim_out_pad) weight: pre-transposed, pre-scaled by w0,
    and zero-padded on the output dim to a multiple of `lane` so the kernel's
    output stores are lane-dense.
    """
    dim_out, dim_in = weight.shape
    w_t = (w0 * weight.astype(jnp.float32)).T.astype(weight.dtype)
    dim_out_p = _round_up(dim_out, lane)
    if dim_out_p != dim_out:
        w_t = jnp.pad(w_t, ((0, 0), (0, dim_out_p - dim_out)))
    return w_t


def _choose_tm(m, dim_in, dim_out_p, itemsize,
               vmem_budget_bytes=12 * 1024 * 1024, tm_cap=2048):
    # Budget: double-buffered x and out tiles + (double-buffered) resident
    # weight. Kept under the smallest scoped-VMEM default (v5e: 16 MiB) and
    # well under v7x's 64 MiB physical VMEM.
    w_bytes = 2 * dim_in * dim_out_p * itemsize
    per_row = 2 * (dim_in + dim_out_p) * itemsize
    tm = max(8, (vmem_budget_bytes - w_bytes) // max(per_row, 1))
    tm = min(tm, tm_cap, _round_up(m, 8))
    return max(8, (tm // 8) * 8)


def modulator_forward(x, w_prepped, dim_out):
    """x: [..., dim_in]; w_prepped: (dim_in, dim_out_pad) from
    prepare_modulator_params (w0 folded in). Returns [..., dim_out]."""
    dim_in, dim_out_p = w_prepped.shape
    lead = x.shape[:-1]
    m = int(math.prod(lead)) if lead else 1
    x2d = x.reshape(m, dim_in)

    itemsize = jnp.dtype(x.dtype).itemsize
    tm = _choose_tm(m, dim_in, dim_out_p, itemsize)
    m_pad = _round_up(m, tm)
    if m_pad != m:
        # Remainder handling: zero-pad rows, slice them off after the call.
        x2d = jnp.pad(x2d, ((0, m_pad - m), (0, 0)))
    n_m = m_pad // tm

    cost = pl.CostEstimate(
        flops=2 * m_pad * dim_in * dim_out_p,
        transcendentals=0,
        bytes_accessed=itemsize * (m_pad * dim_in
                                   + dim_in * dim_out_p
                                   + m_pad * dim_out_p),
    )

    out2d = pl.pallas_call(
        _modulator_kernel,
        out_shape=jax.ShapeDtypeStruct((m_pad, dim_out_p), x.dtype),
        grid=(n_m,),
        in_specs=[
            pl.BlockSpec((tm, dim_in), lambda i: (i, 0)),
            pl.BlockSpec((dim_in, dim_out_p), lambda i: (0, 0)),
        ],
        out_specs=pl.BlockSpec((tm, dim_out_p), lambda i: (i, 0)),
        compiler_params=pltpu.CompilerParams(
            # Parallel M axis: sharded across both TensorCores on v7x,
            # harmless no-op on v5e/v6e.
            dimension_semantics=("parallel",),
            vmem_limit_bytes=32 * 1024 * 1024,
        ),
        cost_estimate=cost,
    )(x2d, w_prepped)

    out2d = out2d[:m, :dim_out]
    return out2d.reshape(*lead, dim_out)


def _init_linear_weight(key, dim_out, dim_in, dtype=jnp.float32):
    # Deterministic init mimicking nn.Linear default (kaiming-uniform),
    # bound = 1/sqrt(fan_in).
    bound = 1.0 / math.sqrt(dim_in)
    return jax.random.uniform(
        key, (dim_out, dim_in), dtype=dtype, minval=-bound, maxval=bound
    )


if __name__ == "__main__":
    key = jax.random.PRNGKey(0)
    k_x, k_w = jax.random.split(key)

    batch, seq, dim_in, dim_out = 2, 8, 32, 64
    w0 = 30.0

    x = jax.random.normal(k_x, (batch, seq, dim_in), dtype=jnp.float32)
    weight = _init_linear_weight(k_w, dim_out, dim_in)

    # One-time parameter prep (transpose + w0 fold + lane padding).
    w_prepped = prepare_modulator_params(weight, w0=w0)

    out = modulator_forward(x, w_prepped, dim_out)
    out = jax.block_until_ready(out)

    # Pure-JAX reference check.
    ref = w0 * (x @ weight.T)
    assert out.shape == (batch, seq, dim_out), out.shape
    assert jnp.allclose(out, ref, atol=1e-3, rtol=1e-4), "mismatch vs reference"

    print("KERNEL_OK")
</pallas_src>

<mosaic_0001>
module attributes {stable_mosaic.version = 11 : i64} {
  func.func @_modulator_kernel(%arg0: i32, %arg1: memref<16x32xf32, #tpu.memory_space<vmem>>, %arg2: memref<32x128xf32, #tpu.memory_space<vmem>>, %arg3: memref<16x128xf32, #tpu.memory_space<vmem>>) attributes {dimension_semantics = [#tpu.dimension_semantics<parallel>], iteration_bounds = array<i64: 1>, scalar_prefetch = 0 : i64, scratch_operands = 0 : i64, tpu.core_type = #tpu.core_type<tc>, window_params = [{transform_indices = @transform_0, window_bounds = array<i64: 16, 32>}, {pipeline_mode = #tpu.pipeline_mode<synchronous>, transform_indices = @transform_1, window_bounds = array<i64: 32, 128>}, {transform_indices = @transform_2, window_bounds = array<i64: 16, 128>}]} {
    %c0 = arith.constant 0 : index
    %c0_0 = arith.constant 0 : index
    %0 = vector.load %arg1[%c0, %c0_0] : memref<16x32xf32, #tpu.memory_space<vmem>>, vector<16x32xf32>
    %c0_1 = arith.constant 0 : index
    %c0_2 = arith.constant 0 : index
    %1 = vector.load %arg2[%c0_1, %c0_2] : memref<32x128xf32, #tpu.memory_space<vmem>>, vector<32x128xf32>
    %cst = arith.constant dense<0.000000e+00> : vector<16x128xf32>
    %2 = tpu.matmul %0, %1, %cst {dimension_numbers = #tpu.dot_dimension_numbers<[1], [0], [0], [1], [0, 0, 1, 1], [], []>} : vector<16x32xf32>, vector<32x128xf32>, vector<16x128xf32> -> vector<16x128xf32>
    %c0_3 = arith.constant 0 : index
    %c0_4 = arith.constant 0 : index
    %3 = vector.load %arg3[%c0_3, %c0_4] : memref<16x128xf32, #tpu.memory_space<vmem>>, vector<16x128xf32>
    tpu.vector_store %arg3[%c0_3, %c0_4], %2 {strides = array<i32>} : memref<16x128xf32, #tpu.memory_space<vmem>>, vector<16x128xf32>,
    return
  }
  func.func @transform_0(%arg0: i32) -> (i32, i32) {
    %c0_i32 = arith.constant 0 : i32
    %c0_i32_0 = arith.constant 0 : i32
    return %arg0, %c0_i32 : i32, i32
  }
  func.func @transform_1(%arg0: i32) -> (i32, i32) {
    %c0_i32 = arith.constant 0 : i32
    %c0_i32_0 = arith.constant 0 : i32
    %c0_i32_1 = arith.constant 0 : i32
    return %c0_i32, %c0_i32_0 : i32, i32
  }
  func.func @transform_2(%arg0: i32) -> (i32, i32) {
    %c0_i32 = arith.constant 0 : i32
    %c0_i32_0 = arith.constant 0 : i32
    return %arg0, %c0_i32 : i32, i32
  }
}

</mosaic_0001>

<llo_original>
// kernel: tpu_custom_call.1
$region0: #{tpu_custom_call.1}
  #allocation0 [shape = 'u32[]', space=smem, size = 0x4, offset = 0x4, fixed_abs, tag = 'smem constant byte address 0x4 - core index']
  #allocation1 [shape = 'u32[72,128]{1,0:T(1,128)}', space=vmem, size = 0x9000, scoped, tag = 'internal scratch']
  %s0 = inlined_call_operand.hbm [shape: f32[16,32], index: 0, kind: input, shape index: {}]
  %s1 = inlined_call_operand.hbm [shape: f32[32,128], index: 1, kind: input, shape index: {}]
  %s2 = inlined_call_operand.hbm [shape: f32[16,128], index: 2, kind: output, shape index: {}]
  %s3 = sld [smem:[#allocation0]]
  $region26: #{tpu_custom_call.1} parent=0
    _
  %s5 = ssub.s32 1, %s3
  %s6 = scalar_select 0, %s5, %s3
  $region1: #{tpu_custom_call.1} parent=0
    #allocation2 [shape = 'u8[8192]{0}', space=vmem, size = 0x2000, scoped, tag = 'input window, operand 0, single buffered']
    #allocation3 [shape = 's32[1]{0}', space=sflag, size = 0x4, scoped, tag = 'scoped memory for tpu_custom_call.1']
    #allocation4 [shape = 's32[1]{0}', space=sflag, size = 0x4, scoped, tag = 'scoped memory for tpu_custom_call.1']
    #allocation5 [shape = 'u8[16384]{0}', space=vmem, size = 0x4000, scoped, tag = 'input window, operand 1, single buffered']
    #allocation6 [shape = 's32[1]{0}', space=sflag, size = 0x4, scoped, tag = 'scoped memory for tpu_custom_call.1']
    #allocation7 [shape = 'u8[8192]{0}', space=vmem, size = 0x2000, scoped, tag = 'output window, operand 0, single buffered']
    %7 = vsyncpa [#allocation3], 0
    %8 = vsyncpa [#allocation6], 0
    %9 = vsyncpa [#allocation4], 0
    // Predicated region
    $region2: #{tpu_custom_call.1} parent=1 // pred_check
      _
    $region3: #{tpu_custom_call.1} parent=1 // pred_check_branch
      %11 = sbr.rel (0) target = $region5
    $region4: #{tpu_custom_call.1} parent=1 // pred_region
      %13 = vsyncadd [#allocation3], 0
      %s14 = sshll.u32 %s0, 4
      %s15 = int_to_ptr.hbm [resolvable:$true] %s14
      %s16 = sshll.u32 [#allocation2], 4
      %s17 = int_to_ptr.vmem [resolvable:$true] %s16
      %22 = dma.hbm_to_vmem [thread:$0]  %s15, 256, %s17, [#allocation3], 128, 128, 8
    $region5: #{tpu_custom_call.1} parent=1 // pred_fallthru
      _
    // Predicated region
    $region6: #{tpu_custom_call.1} parent=1 // pred_check
      _
    $region7: #{tpu_custom_call.1} parent=1 // pred_check_branch
      %24 = sbr.rel (0) target = $region9
    $region8: #{tpu_custom_call.1} parent=1 // pred_region
      %26 = vsyncadd [#allocation6], 0
      %s27 = sshll.u32 %s1, 4
      %s28 = int_to_ptr.hbm [resolvable:$true] %s27
      %s29 = sshll.u32 [#allocation5], 4
      %s30 = int_to_ptr.vmem [resolvable:$true] %s29
      %35 = dma.hbm_to_vmem [thread:$0]  %s28, 512, %s30, [#allocation6], 128, 128, 8
    $region9: #{tpu_custom_call.1} parent=1 // pred_fallthru
      _
    // Predicated region
    $region10: #{tpu_custom_call.1} parent=1 // pred_check
      _
    $region11: #{tpu_custom_call.1} parent=1 // pred_check_branch
      %37 = sbr.rel (0) target = $region13
    $region12: #{tpu_custom_call.1} parent=1 // pred_region
      %39 = dma.done [#allocation3], 256
    $region13: #{tpu_custom_call.1} parent=1 // pred_fallthru
      _
    // Predicated region
    $region14: #{tpu_custom_call.1} parent=1 // pred_check
      _
    $region15: #{tpu_custom_call.1} parent=1 // pred_check_branch
      %41 = sbr.rel (0) target = $region17
    $region16: #{tpu_custom_call.1} parent=1 // pred_region
      %43 = dma.done [#allocation6], 512
    $region17: #{tpu_custom_call.1} parent=1 // pred_fallthru
      _
    %v44 = vld [vmem:[#allocation2] sm:$0xff]
    %v45 = vld [vmem:[#allocation2 + $0x8] sm:$0xff]
    %v46 = vld [vmem:[#allocation5] sm:$0xff]
    %v47 = vld [vmem:[#allocation5 + $0x8] sm:$0xff]
    %v48 = vld [vmem:[#allocation5 + $0x10] sm:$0xff]
    %v49 = vld [vmem:[#allocation5 + $0x18] sm:$0xff]
    %vm50 = vcmask 261120
    %v52 = vsel %vm50, %v44, 0
    %v55 = vsel %vm50, %v45, 0
    %57 = vmatpush.msra.mxu0 0.0
    %58 = vmatpush.msra.mxu0 0.0
    %59 = vmatpush.msra.mxu0 0.0
    %60 = vmatpush.msra.mxu0 0.0
    %61 = vmatpush.msra.mxu0 0.0
    %62 = vmatpush.msra.mxu0 0.0
    %63 = vmatpush.msra.mxu0 0.0
    %64 = vmatpush.msra.mxu0 0.0
    %65 = vmatpush.msra.mxu0 0.0
    %66 = vmatpush.msra.mxu0 0.0
    %67 = vmatpush.msra.mxu0 0.0
    %68 = vmatpush.msra.mxu0 0.0
    %69 = vmatpush.msra.mxu0 %v49
    %70 = vmatpush.msra.mxu0 %v48
    %71 = vmatpush.msra.mxu0 %v47
    %72 = vmatpush.msra.mxu0 %v46
    %73 = vmatmul.f32.gmra.mxu0 %v52
    %v74 = vpop.f32.mrf.mxu0
    %v75 = vadd.f32 0.0, %v74
    %76 = vmatmul.f32.gmra.mxu0 %v55
    %v77 = vpop.f32.mrf.mxu0
    %v78 = vadd.f32 0.0, %v77
    %79 = vdwg.mxu0
    %80 = vst [vmem:[#allocation7] sm:$0xff] %v75
    %81 = vst [vmem:[#allocation7 + $0x8] sm:$0xff] %v78
    // Predicated region
    $region18: #{tpu_custom_call.1} parent=1 // pred_check
      _
    $region19: #{tpu_custom_call.1} parent=1 // pred_check_branch
      %83 = sbr.rel (0) target = $region21
    $region20: #{tpu_custom_call.1} parent=1 // pred_region
      %85 = vsyncadd [#allocation4], 0
      %s86 = sshll.u32 [#allocation7], 4
      %s87 = int_to_ptr.vmem [resolvable:$true] %s86
      %s88 = sshll.u32 %s2, 4
      %s89 = int_to_ptr.hbm [resolvable:$true] %s88
      %94 = dma.vmem_to_hbm [thread:$0]  %s87, 256, %s89, [#allocation4], 128, 128, 8
    $region21: #{tpu_custom_call.1} parent=1 // pred_fallthru
      _
    // Predicated region
    $region22: #{tpu_custom_call.1} parent=1 // pred_check
      _
    $region23: #{tpu_custom_call.1} parent=1 // pred_check_branch
      %96 = sbr.rel (0) target = $region25
    $region24: #{tpu_custom_call.1} parent=1 // pred_region
      %98 = dma.done [#allocation4], 256
    $region25: #{tpu_custom_call.1} parent=1 // pred_fallthru
      _
    %99 = vsyncpa [#allocation3], 1
    %100 = vsyncpa [#allocation6], 1
    %101 = vsyncpa [#allocation4], 1

</llo_original>
